<compile_context>
chip_gen: v6e
topology: v6e:2x2x1
jax: 0.10.0
libtpu: 0.0.40
codegen_flags: <defaults>
</compile_context>

<pallas_src>
import jax
import jax.numpy as jnp
from jax.experimental import pallas as pl
from jax.experimental.pallas import tpu as pltpu


def _sigmoid(v):
    return 1.0 / (1.0 + jnp.exp(-v))


def _ais_generate_kernel(x_ref, w1_ref, b1_ref, w2_ref, b2_ref,
                         wih_ref, bih_ref, whh_ref, bhh_ref,
                         o_ref, h_ref):
    """One (batch_tile, time_step) grid point of the fused MLP + GRU forward."""
    Hp = whh_ref.shape[0]  # padded GRU width (128)

    # New batch tile -> reset the carried hidden state (h0 = 0, as in nn.GRU).
    @pl.when(pl.program_id(1) == 0)
    def _():
        h_ref[...] = jnp.zeros_like(h_ref)

    # Feed-forward part for this time step (lane-dense, 128-wide MXU matmuls).
    h1 = jnp.maximum(
        jnp.dot(x_ref[...], w1_ref[...], preferred_element_type=jnp.float32)
        + b1_ref[...], 0.0)
    h2 = jnp.maximum(
        jnp.dot(h1, w2_ref[...], preferred_element_type=jnp.float32)
        + b2_ref[...], 0.0)
    gx = jnp.dot(h2, wih_ref[...], preferred_element_type=jnp.float32) + bih_ref[...]

    # GRU recurrence (PyTorch gate order: r, z, n).
    h_prev = h_ref[...]
    gh = jnp.dot(h_prev, whh_ref[...], preferred_element_type=jnp.float32) + bhh_ref[...]
    r = _sigmoid(gx[:, :Hp] + gh[:, :Hp])
    z = _sigmoid(gx[:, Hp:2 * Hp] + gh[:, Hp:2 * Hp])
    n = jnp.tanh(gx[:, 2 * Hp:] + r * gh[:, 2 * Hp:])
    h_new = (1.0 - z) * n + z * h_prev

    h_ref[...] = h_new
    o_ref[...] = h_new.astype(o_ref.dtype)


def _round_up(a, m):
    return (a + m - 1) // m * m


def _pad_last(a, new_size):
    pad = [(0, 0)] * (a.ndim - 1) + [(0, new_size - a.shape[-1])]
    return jnp.pad(a, pad)


def _pad_gru_gates(w, h, hp):
    """(rows, 3h) -> (rows, 3hp): zero-pad each of the r/z/n gate blocks to width hp."""
    parts = [_pad_last(w[:, g * h:(g + 1) * h], hp) for g in range(3)]
    return jnp.concatenate(parts, axis=-1)


def _pick_batch_tile(batch):
    bp = _round_up(batch, 8)
    bt = min(512, bp)                      # fixed, aligned tile (multiple of 8, f32)
    if bp >= 16:                           # keep >= 2 steps on the parallel batch axis
        bt = min(bt, _round_up(-(-bp // 2), 8))
    return max(bt, 8)


def ais_generate_1_forward(x, params, *, batch_tile=None):
    """AISGenerate_1 forward: x [B, T, obs_dim + num_actions] -> [B, T, ais_size]."""
    B, T, in_dim = x.shape
    H = params["whh"].shape[0]             # ais_size
    Hp = 128                               # lane-dense padded GRU width
    Dh = 128                               # padded width of the 64-wide l1 output

    # ---- zero-pad parameters to MXU/lane-friendly widths (math unchanged) ----
    w1p = _pad_last(params["w1"], Dh)                                      # (in, 128)
    b1p = _pad_last(params["b1"], Dh)                                      # (1, 128)
    w2p = jnp.pad(params["w2"], ((0, Dh - params["w2"].shape[0]), (0, 0)))  # (128, 128)
    b2p = params["b2"]                                                     # (1, 128)
    wihp = _pad_gru_gates(params["wih"], H, Hp)                            # (128, 384)
    bihp = _pad_gru_gates(params["bih"], H, Hp)                            # (1, 384)
    whhp = jnp.pad(_pad_gru_gates(params["whh"], H, Hp),
                   ((0, Hp - H), (0, 0)))                                  # (128, 384)
    bhhp = _pad_gru_gates(params["bhh"], H, Hp)                            # (1, 384)

    # ---- batch tiling: pad B instead of asserting divisibility ----
    bt = _pick_batch_tile(B) if batch_tile is None else batch_tile
    assert bt % 8 == 0, "batch_tile must be a multiple of 8"
    B_pad = _round_up(B, bt)
    nb = B_pad // bt

    # Time-major, batch-padded, flattened to 2-D rows: row(t, b) = t * B_pad + b.
    xt = jnp.swapaxes(x, 0, 1)                        # (T, B, in)
    if B_pad != B:
        xt = jnp.pad(xt, ((0, 0), (0, B_pad - B), (0, 0)))
    x2 = xt.reshape(T * B_pad, in_dim)

    def x_map(i, t):
        return (t * nb + i, 0)

    def resident(i, t):
        return (0, 0)

    out2 = pl.pallas_call(
        _ais_generate_kernel,
        out_shape=jax.ShapeDtypeStruct((T * B_pad, Hp), x.dtype),
        grid_spec=pltpu.PrefetchScalarGridSpec(
            num_scalar_prefetch=0,
            grid=(nb, T),
            in_specs=[
                pl.BlockSpec((bt, in_dim), x_map),      # x_t tile (streamed, pipelined)
                pl.BlockSpec((in_dim, Dh), resident),   # w1  (resident)
                pl.BlockSpec((1, Dh), resident),        # b1
                pl.BlockSpec((Dh, Dh), resident),       # w2
                pl.BlockSpec((1, Dh), resident),        # b2
                pl.BlockSpec((Dh, 3 * Hp), resident),   # W_ih
                pl.BlockSpec((1, 3 * Hp), resident),    # b_ih
                pl.BlockSpec((Hp, 3 * Hp), resident),   # W_hh
                pl.BlockSpec((1, 3 * Hp), resident),    # b_hh
            ],
            out_specs=pl.BlockSpec((bt, Hp), x_map),    # lane-dense (128-wide) stores
            scratch_shapes=[pltpu.VMEM((bt, Hp), jnp.float32)],  # carried GRU state
        ),
        compiler_params=pltpu.CompilerParams(
            dimension_semantics=("parallel", "arbitrary"),
            vmem_limit_bytes=32 * 1024 * 1024,
        ),
    )(x2, w1p, b1p, w2p, b2p, wihp, bihp, whhp, bhhp)

    out = out2.reshape(T, B_pad, Hp)
    return jnp.swapaxes(out, 0, 1)[:B, :, :H]           # (B, T, ais_size)


def init_params(key, ais_size, obs_dim, num_actions, context_dim=0):
    """PyTorch-style uniform(+/-1/sqrt(fan_in)) init.

    Linear weights stored as [in, out]; GRU weights stored as [in, 3H] / [H, 3H]
    in PyTorch gate order (r, z, n); biases as [1, out]."""
    in_dim = obs_dim + context_dim + num_actions
    H = ais_size
    ks = jax.random.split(key, 8)

    def u(k, shape, fan_in):
        b = 1.0 / float(fan_in) ** 0.5
        return jax.random.uniform(k, shape, jnp.float32, -b, b)

    return {
        "w1": u(ks[0], (in_dim, 64), in_dim), "b1": u(ks[1], (1, 64), in_dim),
        "w2": u(ks[2], (64, 128), 64),        "b2": u(ks[3], (1, 128), 64),
        "wih": u(ks[4], (128, 3 * H), H),     "bih": u(ks[5], (1, 3 * H), H),
        "whh": u(ks[6], (H, 3 * H), H),       "bhh": u(ks[7], (1, 3 * H), H),
    }


def reference_forward(x, params):
    """Pure-JAX reference matching the PyTorch module semantics (full f32 precision)."""
    hp = jax.lax.Precision.HIGHEST
    H = params["whh"].shape[0]
    h = jnp.maximum(jnp.dot(x, params["w1"], precision=hp) + params["b1"], 0.0)
    h = jnp.maximum(jnp.dot(h, params["w2"], precision=hp) + params["b2"], 0.0)
    xs = jnp.swapaxes(h, 0, 1)                          # (T, B, 128)

    def step(h_prev, xt):
        gx = jnp.dot(xt, params["wih"], precision=hp) + params["bih"]
        gh = jnp.dot(h_prev, params["whh"], precision=hp) + params["bhh"]
        r = jax.nn.sigmoid(gx[:, :H] + gh[:, :H])
        z = jax.nn.sigmoid(gx[:, H:2 * H] + gh[:, H:2 * H])
        n = jnp.tanh(gx[:, 2 * H:] + r * gh[:, 2 * H:])
        h_new = (1.0 - z) * n + z * h_prev
        return h_new, h_new

    h0 = jnp.zeros((x.shape[0], H), jnp.float32)
    _, ys = jax.lax.scan(step, h0, xs)
    return jnp.swapaxes(ys, 0, 1)                       # (B, T, ais_size)


if __name__ == "__main__":
    ais_size = 16
    obs_dim = 24
    num_actions = 8
    batch = 8
    seq = 8

    key = jax.random.PRNGKey(0)
    key, kx = jax.random.split(key)
    params = init_params(key, ais_size, obs_dim, num_actions)
    x = jax.random.normal(kx, (batch, seq, obs_dim + num_actions), jnp.float32)

    out = ais_generate_1_forward(x, params)
    out = jax.block_until_ready(out)

    ref = reference_forward(x, params)
    assert out.shape == (batch, seq, ais_size)
    assert jnp.allclose(out, ref, atol=1e-3, rtol=1e-3), "mismatch vs reference"
    print("KERNEL_OK")
</pallas_src>

<mosaic_0001>
module attributes {stable_mosaic.version = 11 : i64} {
  func.func @_ais_generate_kernel(%arg0: i32, %arg1: i32, %arg2: memref<8x32xf32, #tpu.memory_space<vmem>>, %arg3: memref<32x128xf32, #tpu.memory_space<vmem>>, %arg4: memref<1x128xf32, #tpu.memory_space<vmem>>, %arg5: memref<128x128xf32, #tpu.memory_space<vmem>>, %arg6: memref<1x128xf32, #tpu.memory_space<vmem>>, %arg7: memref<128x384xf32, #tpu.memory_space<vmem>>, %arg8: memref<1x384xf32, #tpu.memory_space<vmem>>, %arg9: memref<128x384xf32, #tpu.memory_space<vmem>>, %arg10: memref<1x384xf32, #tpu.memory_space<vmem>>, %arg11: memref<8x128xf32, #tpu.memory_space<vmem>>, %arg12: memref<8x128xf32, #tpu.memory_space<vmem>>) attributes {dimension_semantics = [#tpu.dimension_semantics<parallel>, #tpu.dimension_semantics<arbitrary>], iteration_bounds = array<i64: 1, 8>, scalar_prefetch = 0 : i64, scratch_operands = 1 : i64, tpu.core_type = #tpu.core_type<tc>, window_params = [{transform_indices = @transform_0, window_bounds = array<i64: 8, 32>}, {pipeline_mode = #tpu.pipeline_mode<synchronous>, transform_indices = @transform_1, window_bounds = array<i64: 32, 128>}, {pipeline_mode = #tpu.pipeline_mode<synchronous>, transform_indices = @transform_2, window_bounds = array<i64: 1, 128>}, {pipeline_mode = #tpu.pipeline_mode<synchronous>, transform_indices = @transform_3, window_bounds = array<i64: 128, 128>}, {pipeline_mode = #tpu.pipeline_mode<synchronous>, transform_indices = @transform_4, window_bounds = array<i64: 1, 128>}, {pipeline_mode = #tpu.pipeline_mode<synchronous>, transform_indices = @transform_5, window_bounds = array<i64: 128, 384>}, {pipeline_mode = #tpu.pipeline_mode<synchronous>, transform_indices = @transform_6, window_bounds = array<i64: 1, 384>}, {pipeline_mode = #tpu.pipeline_mode<synchronous>, transform_indices = @transform_7, window_bounds = array<i64: 128, 384>}, {pipeline_mode = #tpu.pipeline_mode<synchronous>, transform_indices = @transform_8, window_bounds = array<i64: 1, 384>}, {transform_indices = @transform_9, window_bounds = array<i64: 8, 128>}]} {
    %c0_i32 = arith.constant 0 : i32
    %0 = arith.cmpi eq, %arg1, %c0_i32 : i32
    %1 = arith.extui %0 : i1 to i32
    %c0_i32_0 = arith.constant 0 : i32
    %2 = arith.cmpi ne, %1, %c0_i32_0 : i32
    scf.if %2 {
      %cst_36 = arith.constant 0.000000e+00 : f32
      %61 = vector.broadcast %cst_36 : f32 to vector<8x128xf32>
      %c0_37 = arith.constant 0 : index
      %c0_38 = arith.constant 0 : index
      %62 = vector.load %arg12[%c0_37, %c0_38] : memref<8x128xf32, #tpu.memory_space<vmem>>, vector<8x128xf32>
      tpu.vector_store %arg12[%c0_37, %c0_38], %61 {strides = array<i32>} : memref<8x128xf32, #tpu.memory_space<vmem>>, vector<8x128xf32>,
    } else {
    }
    %c0 = arith.constant 0 : index
    %c0_1 = arith.constant 0 : index
    %3 = vector.load %arg2[%c0, %c0_1] : memref<8x32xf32, #tpu.memory_space<vmem>>, vector<8x32xf32>
    %c0_2 = arith.constant 0 : index
    %c0_3 = arith.constant 0 : index
    %4 = vector.load %arg3[%c0_2, %c0_3] : memref<32x128xf32, #tpu.memory_space<vmem>>, vector<32x128xf32>
    %cst = arith.constant dense<0.000000e+00> : vector<8x128xf32>
    %5 = tpu.matmul %3, %4, %cst {dimension_numbers = #tpu.dot_dimension_numbers<[1], [0], [0], [1], [0, 0, 1, 1], [], []>} : vector<8x32xf32>, vector<32x128xf32>, vector<8x128xf32> -> vector<8x128xf32>
    %c0_4 = arith.constant 0 : index
    %c0_5 = arith.constant 0 : index
    %6 = vector.load %arg4[%c0_4, %c0_5] : memref<1x128xf32, #tpu.memory_space<vmem>>, vector<1x128xf32>
    %7 = vector.broadcast %6 : vector<1x128xf32> to vector<8x128xf32>
    %8 = arith.addf %5, %7 : vector<8x128xf32>
    %cst_6 = arith.constant 0.000000e+00 : f32
    %9 = vector.broadcast %cst_6 : f32 to vector<8x128xf32>
    %10 = arith.maximumf %8, %9 : vector<8x128xf32>
    %c0_7 = arith.constant 0 : index
    %c0_8 = arith.constant 0 : index
    %11 = vector.load %arg5[%c0_7, %c0_8] : memref<128x128xf32, #tpu.memory_space<vmem>>, vector<128x128xf32>
    %cst_9 = arith.constant dense<0.000000e+00> : vector<8x128xf32>
    %12 = tpu.matmul %10, %11, %cst_9 {dimension_numbers = #tpu.dot_dimension_numbers<[1], [0], [0], [1], [0, 0, 1, 1], [], []>} : vector<8x128xf32>, vector<128x128xf32>, vector<8x128xf32> -> vector<8x128xf32>
    %c0_10 = arith.constant 0 : index
    %c0_11 = arith.constant 0 : index
    %13 = vector.load %arg6[%c0_10, %c0_11] : memref<1x128xf32, #tpu.memory_space<vmem>>, vector<1x128xf32>
    %14 = vector.broadcast %13 : vector<1x128xf32> to vector<8x128xf32>
    %15 = arith.addf %12, %14 : vector<8x128xf32>
    %cst_12 = arith.constant 0.000000e+00 : f32
    %16 = vector.broadcast %cst_12 : f32 to vector<8x128xf32>
    %17 = arith.maximumf %15, %16 : vector<8x128xf32>
    %c0_13 = arith.constant 0 : index
    %c0_14 = arith.constant 0 : index
    %18 = vector.load %arg7[%c0_13, %c0_14] : memref<128x384xf32, #tpu.memory_space<vmem>>, vector<128x384xf32>
    %cst_15 = arith.constant dense<0.000000e+00> : vector<8x384xf32>
    %19 = tpu.matmul %17, %18, %cst_15 {dimension_numbers = #tpu.dot_dimension_numbers<[1], [0], [0], [1], [0, 0, 1, 1], [], []>} : vector<8x128xf32>, vector<128x384xf32>, vector<8x384xf32> -> vector<8x384xf32>
    %c0_16 = arith.constant 0 : index
    %c0_17 = arith.constant 0 : index
    %20 = vector.load %arg8[%c0_16, %c0_17] : memref<1x384xf32, #tpu.memory_space<vmem>>, vector<1x384xf32>
    %21 = vector.broadcast %20 : vector<1x384xf32> to vector<8x384xf32>
    %22 = arith.addf %19, %21 : vector<8x384xf32>
    %c0_18 = arith.constant 0 : index
    %c0_19 = arith.constant 0 : index
    %23 = vector.load %arg12[%c0_18, %c0_19] : memref<8x128xf32, #tpu.memory_space<vmem>>, vector<8x128xf32>
    %c0_20 = arith.constant 0 : index
    %c0_21 = arith.constant 0 : index
    %24 = vector.load %arg9[%c0_20, %c0_21] : memref<128x384xf32, #tpu.memory_space<vmem>>, vector<128x384xf32>
    %cst_22 = arith.constant dense<0.000000e+00> : vector<8x384xf32>
    %25 = tpu.matmul %23, %24, %cst_22 {dimension_numbers = #tpu.dot_dimension_numbers<[1], [0], [0], [1], [0, 0, 1, 1], [], []>} : vector<8x128xf32>, vector<128x384xf32>, vector<8x384xf32> -> vector<8x384xf32>
    %c0_23 = arith.constant 0 : index
    %c0_24 = arith.constant 0 : index
    %26 = vector.load %arg10[%c0_23, %c0_24] : memref<1x384xf32, #tpu.memory_space<vmem>>, vector<1x384xf32>
    %27 = vector.broadcast %26 : vector<1x384xf32> to vector<8x384xf32>
    %28 = arith.addf %25, %27 : vector<8x384xf32>
    %29 = vector.extract_strided_slice %22 {offsets = [0, 0], sizes = [8, 128], strides = [1, 1]} : vector<8x384xf32> to vector<8x128xf32>
    %30 = vector.extract_strided_slice %28 {offsets = [0, 0], sizes = [8, 128], strides = [1, 1]} : vector<8x384xf32> to vector<8x128xf32>
    %31 = arith.addf %29, %30 : vector<8x128xf32>
    %cst_25 = arith.constant 0.000000e+00 : f32
    %32 = vector.broadcast %cst_25 : f32 to vector<8x128xf32>
    %33 = arith.subf %32, %31 : vector<8x128xf32>
    %34 = math.exp %33 : vector<8x128xf32>
    %cst_26 = arith.constant 1.000000e+00 : f32
    %35 = vector.broadcast %cst_26 : f32 to vector<8x128xf32>
    %36 = arith.addf %35, %34 : vector<8x128xf32>
    %cst_27 = arith.constant 1.000000e+00 : f32
    %37 = vector.broadcast %cst_27 : f32 to vector<8x128xf32>
    %38 = arith.divf %37, %36 : vector<8x128xf32>
    %39 = vector.extract_strided_slice %22 {offsets = [0, 128], sizes = [8, 128], strides = [1, 1]} : vector<8x384xf32> to vector<8x128xf32>
    %40 = vector.extract_strided_slice %28 {offsets = [0, 128], sizes = [8, 128], strides = [1, 1]} : vector<8x384xf32> to vector<8x128xf32>
    %41 = arith.addf %39, %40 : vector<8x128xf32>
    %cst_28 = arith.constant 0.000000e+00 : f32
    %42 = vector.broadcast %cst_28 : f32 to vector<8x128xf32>
    %43 = arith.subf %42, %41 : vector<8x128xf32>
    %44 = math.exp %43 : vector<8x128xf32>
    %cst_29 = arith.constant 1.000000e+00 : f32
    %45 = vector.broadcast %cst_29 : f32 to vector<8x128xf32>
    %46 = arith.addf %45, %44 : vector<8x128xf32>
    %cst_30 = arith.constant 1.000000e+00 : f32
    %47 = vector.broadcast %cst_30 : f32 to vector<8x128xf32>
    %48 = arith.divf %47, %46 : vector<8x128xf32>
    %49 = vector.extract_strided_slice %22 {offsets = [0, 256], sizes = [8, 128], strides = [1, 1]} : vector<8x384xf32> to vector<8x128xf32>
    %50 = vector.extract_strided_slice %28 {offsets = [0, 256], sizes = [8, 128], strides = [1, 1]} : vector<8x384xf32> to vector<8x128xf32>
    %51 = arith.mulf %38, %50 : vector<8x128xf32>
    %52 = arith.addf %49, %51 : vector<8x128xf32>
    %53 = math.tanh %52 : vector<8x128xf32>
    %cst_31 = arith.constant 1.000000e+00 : f32
    %54 = vector.broadcast %cst_31 : f32 to vector<8x128xf32>
    %55 = arith.subf %54, %48 : vector<8x128xf32>
    %56 = arith.mulf %55, %53 : vector<8x128xf32>
    %57 = arith.mulf %48, %23 : vector<8x128xf32>
    %58 = arith.addf %56, %57 : vector<8x128xf32>
    %c0_32 = arith.constant 0 : index
    %c0_33 = arith.constant 0 : index
    %59 = vector.load %arg12[%c0_32, %c0_33] : memref<8x128xf32, #tpu.memory_space<vmem>>, vector<8x128xf32>
    tpu.vector_store %arg12[%c0_32, %c0_33], %58 {strides = array<i32>} : memref<8x128xf32, #tpu.memory_space<vmem>>, vector<8x128xf32>,
    %c0_34 = arith.constant 0 : index
    %c0_35 = arith.constant 0 : index
    %60 = vector.load %arg11[%c0_34, %c0_35] : memref<8x128xf32, #tpu.memory_space<vmem>>, vector<8x128xf32>
    tpu.vector_store %arg11[%c0_34, %c0_35], %58 {strides = array<i32>} : memref<8x128xf32, #tpu.memory_space<vmem>>, vector<8x128xf32>,
    return
  }
  func.func @transform_0(%arg0: i32, %arg1: i32) -> (i32, i32) {
    %c1_i32 = arith.constant 1 : i32
    %0 = arith.muli %arg1, %c1_i32 : i32
    %1 = arith.addi %0, %arg0 : i32
    %c0_i32 = arith.constant 0 : i32
    %c0_i32_0 = arith.constant 0 : i32
    return %1, %c0_i32 : i32, i32
  }
  func.func @transform_1(%arg0: i32, %arg1: i32) -> (i32, i32) {
    %c0_i32 = arith.constant 0 : i32
    %c0_i32_0 = arith.constant 0 : i32
    %c0_i32_1 = arith.constant 0 : i32
    return %c0_i32, %c0_i32_0 : i32, i32
  }
  func.func @transform_2(%arg0: i32, %arg1: i32) -> (i32, i32) {
    %c0_i32 = arith.constant 0 : i32
    %c0_i32_0 = arith.constant 0 : i32
    %c0_i32_1 = arith.constant 0 : i32
    return %c0_i32, %c0_i32_0 : i32, i32
  }
  func.func @transform_3(%arg0: i32, %arg1: i32) -> (i32, i32) {
    %c0_i32 = arith.constant 0 : i32
    %c0_i32_0 = arith.constant 0 : i32
    %c0_i32_1 = arith.constant 0 : i32
    return %c0_i32, %c0_i32_0 : i32, i32
  }
  func.func @transform_4(%arg0: i32, %arg1: i32) -> (i32, i32) {
    %c0_i32 = arith.constant 0 : i32
    %c0_i32_0 = arith.constant 0 : i32
    %c0_i32_1 = arith.constant 0 : i32
    return %c0_i32, %c0_i32_0 : i32, i32
  }
  func.func @transform_5(%arg0: i32, %arg1: i32) -> (i32, i32) {
    %c0_i32 = arith.constant 0 : i32
    %c0_i32_0 = arith.constant 0 : i32
    %c0_i32_1 = arith.constant 0 : i32
    return %c0_i32, %c0_i32_0 : i32, i32
  }
  func.func @transform_6(%arg0: i32, %arg1: i32) -> (i32, i32) {
    %c0_i32 = arith.constant 0 : i32
    %c0_i32_0 = arith.constant 0 : i32
    %c0_i32_1 = arith.constant 0 : i32
    return %c0_i32, %c0_i32_0 : i32, i32
  }
  func.func @transform_7(%arg0: i32, %arg1: i32) -> (i32, i32) {
    %c0_i32 = arith.constant 0 : i32
    %c0_i32_0 = arith.constant 0 : i32
    %c0_i32_1 = arith.constant 0 : i32
    return %c0_i32, %c0_i32_0 : i32, i32
  }
  func.func @transform_8(%arg0: i32, %arg1: i32) -> (i32, i32) {
    %c0_i32 = arith.constant 0 : i32
    %c0_i32_0 = arith.constant 0 : i32
    %c0_i32_1 = arith.constant 0 : i32
    return %c0_i32, %c0_i32_0 : i32, i32
  }
  func.func @transform_9(%arg0: i32, %arg1: i32) -> (i32, i32) {
    %c1_i32 = arith.constant 1 : i32
    %0 = arith.muli %arg1, %c1_i32 : i32
    %1 = arith.addi %0, %arg0 : i32
    %c0_i32 = arith.constant 0 : i32
    %c0_i32_0 = arith.constant 0 : i32
    return %1, %c0_i32 : i32, i32
  }
}

</mosaic_0001>

<llo_original>
// kernel: tpu_custom_call.1
$region0: #{tpu_custom_call.1}
  #allocation0 [shape = 'u32[]', space=smem, size = 0x4, offset = 0x4, fixed_abs, tag = 'smem constant byte address 0x4 - core index']
  #allocation1 [shape = 'u32[144,128]{1,0:T(1,128)}', space=vmem, size = 0x12000, scoped, tag = 'internal scratch']
  #allocation2 [shape = 'f32[8,128]{1,0:T(8,128)}', space=vmem, size = 0x1000, scoped, tag = 'scratch operand']
  %s0 = inlined_call_operand.vmem [shape: f32[64,32], index: 0, kind: input, shape index: {}]
  %s1 = inlined_call_operand.vmem [shape: f32[32,128], index: 1, kind: input, shape index: {}]
  %s2 = inlined_call_operand.vmem [shape: f32[1,128], index: 2, kind: input, shape index: {}]
  %s3 = inlined_call_operand.hbm [shape: f32[128,128], index: 3, kind: input, shape index: {}]
  %s4 = inlined_call_operand.vmem [shape: f32[1,128], index: 4, kind: input, shape index: {}]
  %s5 = inlined_call_operand.hbm [shape: f32[128,384], index: 5, kind: input, shape index: {}]
  %s6 = inlined_call_operand.vmem [shape: f32[1,384], index: 6, kind: input, shape index: {}]
  %s7 = inlined_call_operand.hbm [shape: f32[128,384], index: 7, kind: input, shape index: {}]
  %s8 = inlined_call_operand.vmem [shape: f32[1,384], index: 8, kind: input, shape index: {}]
  %s9 = inlined_call_operand.hbm [shape: f32[64,128], index: 9, kind: output, shape index: {}]
  %s10 = sld [smem:[#allocation0]]
  $region85: #{tpu_custom_call.1} parent=0
    _
  %s12 = ssub.s32 1, %s10
  %s13 = scalar_select 0, %s12, %s10
  $region1: #{tpu_custom_call.1} parent=0
    #allocation3 [shape = 'u8[65536]{0}', space=vmem, size = 0x10000, scoped, tag = 'input window, operand 3, single buffered']
    #allocation4 [shape = 's32[2]{0}', space=sflag, size = 0x8, scoped, tag = 'scoped memory for tpu_custom_call.1']
    #allocation5 [shape = 's32[2]{0}', space=sflag, size = 0x8, scoped, tag = 'scoped memory for tpu_custom_call.1']
    #allocation6 [shape = 'u8[196608]{0}', space=vmem, size = 0x30000, scoped, tag = 'input window, operand 5, single buffered']
    #allocation7 [shape = 's32[1]{0}', space=sflag, size = 0x4, scoped, tag = 'scoped memory for tpu_custom_call.1']
    #allocation8 [shape = 'u8[196608]{0}', space=vmem, size = 0x30000, scoped, tag = 'input window, operand 7, single buffered']
    #allocation9 [shape = 'u8[8192]{0}', space=vmem, size = 0x2000, scoped, tag = 'output window, operand 0']
    %14 = vsyncpa [#allocation4], 0
    %15 = vsyncpa [#allocation7], 0
    %16 = vsyncpa [#allocation5], 0
    %s17 = scalar_lea.sflag [#allocation5], 1
    %18 = vsyncpa %s17, 0
    loop: start=0, step=1, limit=10
    $region2: #{tpu_custom_call.1} parent=1 // loop_pre_header
      _
    $region3: #{tpu_custom_call.1} parent=1 // loop_header
      %s20 = sphi 0, %s24
      %p21 = scmp.ge.s32.totalorder %s20, 10
      %s27 = sphi 0, %s39
      %s28 = sphi 0, %s35
      %s29 = sphi 0, %s27
      %s30 = sphi 0, %s28
      %s31 = sphi 0, %s29
      %s32 = sphi 0, %s30
      %s44 = sphi 0, %s46
      %s47 = sphi 0, %s44
      %s48 = sphi 0, %s47
      %s64 = sphi 0, %s48
      %s68 = sphi 0, %s68
      %s70 = sphi 0, %s68
      %s71 = sphi 0, %s70
      %s85 = sphi 0, %s71
      %s89 = sphi 0, %s89
      %s91 = sphi 0, %s89
      %s92 = sphi 0, %s91
      %s106 = sphi 0, %s92
      %s110 = sphi 0, %s110
      %s112 = sphi 0, %s110
      %s113 = sphi 0, %s112
      %s127 = sphi 0, %s113
      %s131 = sphi 0, %s131
      %s133 = sphi 0, %s131
      %s134 = sphi 0, %s133
      %s148 = sphi 0, %s134
      %s152 = sphi 0, %s152
      %s154 = sphi 0, %s152
      %s155 = sphi 0, %s154
      %s169 = sphi 0, %s155
      %s173 = sphi 0, %s173
      %s175 = sphi 0, %s173
      %s176 = sphi 0, %s175
      %s190 = sphi 0, %s176
      %s194 = sphi 0, %s194
      %s196 = sphi 0, %s194
      %s197 = sphi 0, %s196
      %s211 = sphi 0, %s197
      %s215 = sphi 0, %s215
      %s217 = sphi 0, %s215
      %s218 = sphi 0, %s217
      %s232 = sphi 0, %s218
      %s240 = sphi 0, %s242
      %s243 = sphi 0, %s240
      %s244 = sphi 0, %s243
      %s260 = sphi 0, %s244
    $region4: #{tpu_custom_call.1} parent=1 // loop_header_branch
      %23 = sbr.rel (%p21) target = $region8
    $region5: #{tpu_custom_call.1} parent=1 // loop_body
      %s25 = ssub.s32 %s20, 1
      %s26 = ssub.s32 %s20, 2
      %s33 = sadd.s32 1, %s28
      %p34 = scmp.ge.s32.totalorder %s33, 8
      %s35 = scalar_select %p34, 0, %s33
      %s36 = sadd.s32 1, %s27
      %s37 = scalar_select %p34, %s36, %s27
      %p38 = scmp.ge.s32.totalorder %s37, 1
      %s39 = scalar_select %p38, 0, %s37
      %s40 = sadd.s32 %s28, %s27
      %s41 = sadd.s32 %s35, %s39
      %s42 = ssub.s32 %s40, %s41
      %p43 = scmp.eq.s32.totalorder %s42, 0
      %s45 = sadd.s32 %s44, 1
      %s46 = scalar_select %p43, %s44, %s45
      %p49 = pneg %p43
      %p50 = scmp.eq.s32.totalorder %s20, 7
      %p51 = por %p49, %p50
      %p52 = scmp.ne.s32.totalorder %s44, %s47
      %p53 = scmp.eq.s32.totalorder %s20, 0
      %p54 = por %p52, %p53
      %p55 = scmp.ne.s32.totalorder %s44, %s47
      %p56 = scmp.eq.s32.totalorder %s25, 7
      %p57 = por %p55, %p56
      %p58 = scmp.ne.s32.totalorder %s47, %s48
      %p59 = scmp.eq.s32.totalorder %s25, 0
      %p60 = por %p58, %p59
      %p61 = scmp.ne.s32.totalorder %s47, %s48
      %p62 = scmp.eq.s32.totalorder %s26, 7
      %p63 = por %p61, %p62
      %p65 = scmp.ne.s32.totalorder %s48, %s64
      %p66 = scmp.eq.s32.totalorder %s26, 0
      %p67 = por %p65, %p66
      %s69 = sadd.s32 %s68, 1
      %p72 = scmp.eq.s32.totalorder %s20, 7
      %p73 = scmp.ne.s32.totalorder %s68, %s70
      %p74 = scmp.eq.s32.totalorder %s20, 0
      %p75 = por %p73, %p74
      %p76 = scmp.ne.s32.totalorder %s68, %s70
      %p77 = scmp.eq.s32.totalorder %s25, 7
      %p78 = por %p76, %p77
      %p79 = scmp.ne.s32.totalorder %s70, %s71
      %p80 = scmp.eq.s32.totalorder %s25, 0
      %p81 = por %p79, %p80
      %p82 = scmp.ne.s32.totalorder %s70, %s71
      %p83 = scmp.eq.s32.totalorder %s26, 7
      %p84 = por %p82, %p83
      %p86 = scmp.ne.s32.totalorder %s71, %s85
      %p87 = scmp.eq.s32.totalorder %s26, 0
      %p88 = por %p86, %p87
      %s90 = sadd.s32 %s89, 1
      %p93 = scmp.eq.s32.totalorder %s20, 7
      %p94 = scmp.ne.s32.totalorder %s89, %s91
      %p95 = scmp.eq.s32.totalorder %s20, 0
      %p96 = por %p94, %p95
      %p97 = scmp.ne.s32.totalorder %s89, %s91
      %p98 = scmp.eq.s32.totalorder %s25, 7
      %p99 = por %p97, %p98
      %p100 = scmp.ne.s32.totalorder %s91, %s92
      %p101 = scmp.eq.s32.totalorder %s25, 0
      %p102 = por %p100, %p101
      %p103 = scmp.ne.s32.totalorder %s91, %s92
      %p104 = scmp.eq.s32.totalorder %s26, 7
      %p105 = por %p103, %p104
      %p107 = scmp.ne.s32.totalorder %s92, %s106
      %p108 = scmp.eq.s32.totalorder %s26, 0
      %p109 = por %p107, %p108
      %s111 = sadd.s32 %s110, 1
      %p114 = scmp.eq.s32.totalorder %s20, 7
      %p115 = scmp.ne.s32.totalorder %s110, %s112
      %p116 = scmp.eq.s32.totalorder %s20, 0
      %p117 = por %p115, %p116
      %p118 = scmp.ne.s32.totalorder %s110, %s112
      %p119 = scmp.eq.s32.totalorder %s25, 7
      %p120 = por %p118, %p119
      %p121 = scmp.ne.s32.totalorder %s112, %s113
      %p122 = scmp.eq.s32.totalorder %s25, 0
      %p123 = por %p121, %p122
      %p124 = scmp.ne.s32.totalorder %s112, %s113
      %p125 = scmp.eq.s32.totalorder %s26, 7
      %p126 = por %p124, %p125
      %p128 = scmp.ne.s32.totalorder %s113, %s127
      %p129 = scmp.eq.s32.totalorder %s26, 0
      %p130 = por %p128, %p129
      %s132 = sadd.s32 %s131, 1
      %p135 = scmp.eq.s32.totalorder %s20, 7
      %p136 = scmp.ne.s32.totalorder %s131, %s133
      %p137 = scmp.eq.s32.totalorder %s20, 0
      %p138 = por %p136, %p137
      %p139 = scmp.ne.s32.totalorder %s131, %s133
      %p140 = scmp.eq.s32.totalorder %s25, 7
      %p141 = por %p139, %p140
      %p142 = scmp.ne.s32.totalorder %s133, %s134
      %p143 = scmp.eq.s32.totalorder %s25, 0
      %p144 = por %p142, %p143
      %p145 = scmp.ne.s32.totalorder %s133, %s134
      %p146 = scmp.eq.s32.totalorder %s26, 7
      %p147 = por %p145, %p146
      %p149 = scmp.ne.s32.totalorder %s134, %s148
      %p150 = scmp.eq.s32.totalorder %s26, 0
      %p151 = por %p149, %p150
      %s153 = sadd.s32 %s152, 1
      %p156 = scmp.eq.s32.totalorder %s20, 7
      %p157 = scmp.ne.s32.totalorder %s152, %s154
      %p158 = scmp.eq.s32.totalorder %s20, 0
      %p159 = por %p157, %p158
      %p160 = scmp.ne.s32.totalorder %s152, %s154
      %p161 = scmp.eq.s32.totalorder %s25, 7
      %p162 = por %p160, %p161
      %p163 = scmp.ne.s32.totalorder %s154, %s155
      %p164 = scmp.eq.s32.totalorder %s25, 0
      %p165 = por %p163, %p164
      %p166 = scmp.ne.s32.totalorder %s154, %s155
      %p167 = scmp.eq.s32.totalorder %s26, 7
      %p168 = por %p166, %p167
      %p170 = scmp.ne.s32.totalorder %s155, %s169
      %p171 = scmp.eq.s32.totalorder %s26, 0
      %p172 = por %p170, %p171
      %s174 = sadd.s32 %s173, 1
      %p177 = scmp.eq.s32.totalorder %s20, 7
      %p178 = scmp.ne.s32.totalorder %s173, %s175
      %p179 = scmp.eq.s32.totalorder %s20, 0
      %p180 = por %p178, %p179
      %p181 = scmp.ne.s32.totalorder %s173, %s175
      %p182 = scmp.eq.s32.totalorder %s25, 7
      %p183 = por %p181, %p182
      %p184 = scmp.ne.s32.totalorder %s175, %s176
      %p185 = scmp.eq.s32.totalorder %s25, 0
      %p186 = por %p184, %p185
      %p187 = scmp.ne.s32.totalorder %s175, %s176
      %p188 = scmp.eq.s32.totalorder %s26, 7
      %p189 = por %p187, %p188
      %p191 = scmp.ne.s32.totalorder %s176, %s190
      %p192 = scmp.eq.s32.totalorder %s26, 0
      %p193 = por %p191, %p192
      %s195 = sadd.s32 %s194, 1
      %p198 = scmp.eq.s32.totalorder %s20, 7
      %p199 = scmp.ne.s32.totalorder %s194, %s196
      %p200 = scmp.eq.s32.totalorder %s20, 0
      %p201 = por %p199, %p200
      %p202 = scmp.ne.s32.totalorder %s194, %s196
      %p203 = scmp.eq.s32.totalorder %s25, 7
      %p204 = por %p202, %p203
      %p205 = scmp.ne.s32.totalorder %s196, %s197
      %p206 = scmp.eq.s32.totalorder %s25, 0
      %p207 = por %p205, %p206
      %p208 = scmp.ne.s32.totalorder %s196, %s197
      %p209 = scmp.eq.s32.totalorder %s26, 7
      %p210 = por %p208, %p209
      %p212 = scmp.ne.s32.totalorder %s197, %s211
      %p213 = scmp.eq.s32.totalorder %s26, 0
      %p214 = por %p212, %p213
      %s216 = sadd.s32 %s215, 1
      %p219 = scmp.eq.s32.totalorder %s20, 7
      %p220 = scmp.ne.s32.totalorder %s215, %s217
      %p221 = scmp.eq.s32.totalorder %s20, 0
      %p222 = por %p220, %p221
      %p223 = scmp.ne.s32.totalorder %s215, %s217
      %p224 = scmp.eq.s32.totalorder %s25, 7
      %p225 = por %p223, %p224
      %p226 = scmp.ne.s32.totalorder %s217, %s218
      %p227 = scmp.eq.s32.totalorder %s25, 0
      %p228 = por %p226, %p227
      %p229 = scmp.ne.s32.totalorder %s217, %s218
      %p230 = scmp.eq.s32.totalorder %s26, 7
      %p231 = por %p229, %p230
      %p233 = scmp.ne.s32.totalorder %s218, %s232
      %p234 = scmp.eq.s32.totalorder %s26, 0
      %p235 = por %p233, %p234
      %s236 = sadd.s32 %s28, %s27
      %s237 = sadd.s32 %s35, %s39
      %s238 = ssub.s32 %s236, %s237
      %p239 = scmp.eq.s32.totalorder %s238, 0
      %s241 = sadd.s32 %s240, 1
      %s242 = scalar_select %p239, %s240, %s241
      %p245 = pneg %p239
      %p246 = scmp.eq.s32.totalorder %s20, 7
      %p247 = por %p245, %p246
      %p248 = scmp.ne.s32.totalorder %s240, %s243
      %p249 = scmp.eq.s32.totalorder %s20, 0
      %p250 = por %p248, %p249
      %p251 = scmp.ne.s32.totalorder %s240, %s243
      %p252 = scmp.eq.s32.totalorder %s25, 7
      %p253 = por %p251, %p252
      %p254 = scmp.ne.s32.totalorder %s243, %s244
      %p255 = scmp.eq.s32.totalorder %s25, 0
      %p256 = por %p254, %p255
      %p257 = scmp.ne.s32.totalorder %s243, %s244
      %p258 = scmp.eq.s32.totalorder %s26, 7
      %p259 = por %p257, %p258
      %p261 = scmp.ne.s32.totalorder %s244, %s260
      %p262 = scmp.eq.s32.totalorder %s26, 0
      %p263 = por %p261, %p262
      %p264 = scmp.le.s32.totalorder 1, %s20
      %p265 = scmp.lt.s32.totalorder %s20, 9
      %p266 = pnand %p264, %p265
      %p267 = pneg %p266
      // Predicated region
      $region9: #{tpu_custom_call.1} parent=5 // pred_check
        _
      $region10: #{tpu_custom_call.1} parent=5 // pred_check_branch
        %269 = sbr.rel (%p266) target = $region12
      $region11: #{tpu_custom_call.1} parent=5 // pred_region
        %s270 = ssub.s32 %s20, 1
        // Predicated region
        $region13: #{tpu_custom_call.1} parent=11 // pred_check
          %p271 = pneg %p81
        $region14: #{tpu_custom_call.1} parent=11 // pred_check_branch
          %273 = sbr.rel (%p271) target = $region16
        $region15: #{tpu_custom_call.1} parent=11 // pred_region
          _
        $region16: #{tpu_custom_call.1} parent=11 // pred_fallthru
          _
        // Predicated region
        $region17: #{tpu_custom_call.1} parent=11 // pred_check
          %p274 = pneg %p102
        $region18: #{tpu_custom_call.1} parent=11 // pred_check_branch
          %276 = sbr.rel (%p274) target = $region20
        $region19: #{tpu_custom_call.1} parent=11 // pred_region
          _
        $region20: #{tpu_custom_call.1} parent=11 // pred_fallthru
          _
        // Predicated region
        $region21: #{tpu_custom_call.1} parent=11 // pred_check
          %p277 = pneg %p123
        $region22: #{tpu_custom_call.1} parent=11 // pred_check_branch
          %279 = sbr.rel (%p277) target = $region24
        $region23: #{tpu_custom_call.1} parent=11 // pred_region
          %s281 = ssub.s32 2048, 2048
          %282 = vsyncadd [#allocation4], %s281
          %s283 = sshll.u32 [#allocation3], 4
          %s284 = int_to_ptr.vmem [resolvable:$true] %s283
          %289 = dma.hbm_to_vmem [thread:$0]  %s3, 2048, %s284, [#allocation4], 128, 128, 8
        $region24: #{tpu_custom_call.1} parent=11 // pred_fallthru
          _
        // Predicated region
        $region25: #{tpu_custom_call.1} parent=11 // pred_check
          %p290 = pneg %p144
        $region26: #{tpu_custom_call.1} parent=11 // pred_check_branch
          %292 = sbr.rel (%p290) target = $region28
        $region27: #{tpu_custom_call.1} parent=11 // pred_region
          _
        $region28: #{tpu_custom_call.1} parent=11 // pred_fallthru
          _
        // Predicated region
        $region29: #{tpu_custom_call.1} parent=11 // pred_check
          %p293 = pneg %p165
        $region30: #{tpu_custom_call.1} parent=11 // pred_check_branch
          %295 = sbr.rel (%p293) target = $region32
        $region31: #{tpu_custom_call.1} parent=11 // pred_region
          %s297 = ssub.s32 6144, 6144
          %298 = vsyncadd [#allocation7], %s297
          %s299 = sshll.u32 [#allocation6], 4
          %s300 = int_to_ptr.vmem [resolvable:$true] %s299
          %305 = dma.hbm_to_vmem [thread:$0]  %s5, 6144, %s300, [#allocation7], 384, 384, 24
        $region32: #{tpu_custom_call.1} parent=11 // pred_fallthru
          _
        // Predicated region
        $region33: #{tpu_custom_call.1} parent=11 // pred_check
          %p306 = pneg %p186
        $region34: #{tpu_custom_call.1} parent=11 // pred_check_branch
          %308 = sbr.rel (%p306) target = $region36
        $region35: #{tpu_custom_call.1} parent=11 // pred_region
          _
        $region36: #{tpu_custom_call.1} parent=11 // pred_fallthru
          _
        // Predicated region
        $region37: #{tpu_custom_call.1} parent=11 // pred_check
          %p309 = pneg %p207
        $region38: #{tpu_custom_call.1} parent=11 // pred_check_branch
          %311 = sbr.rel (%p309) target = $region40
        $region39: #{tpu_custom_call.1} parent=11 // pred_region
          %s313 = ssub.s32 6144, 6144
          %314 = vsyncadd [#allocation7], %s313
          %s315 = sshll.u32 [#allocation8], 4
          %s316 = int_to_ptr.vmem [resolvable:$true] %s315
          %321 = dma.hbm_to_vmem [thread:$0]  %s7, 6144, %s316, [#allocation7], 384, 384, 24
        $region40: #{tpu_custom_call.1} parent=11 // pred_fallthru
          _
        // Predicated region
        $region41: #{tpu_custom_call.1} parent=11 // pred_check
          %p322 = pneg %p228
        $region42: #{tpu_custom_call.1} parent=11 // pred_check_branch
          %324 = sbr.rel (%p322) target = $region44
        $region43: #{tpu_custom_call.1} parent=11 // pred_region
          _
        $region44: #{tpu_custom_call.1} parent=11 // pred_fallthru
          _
      $region12: #{tpu_custom_call.1} parent=5 // pred_fallthru
        _
      %p325 = scmp.lt.s32.totalorder %s20, 8
      // Predicated region
      $region45: #{tpu_custom_call.1} parent=5 // pred_check
        %p326 = pneg %p325
      $region46: #{tpu_custom_call.1} parent=5 // pred_check_branch
        %328 = sbr.rel (%p326) target = $region48
      $region47: #{tpu_custom_call.1} parent=5 // pred_region
        // Predicated region
        $region49: #{tpu_custom_call.1} parent=47 // pred_check
          %p329 = pneg %p54
        $region50: #{tpu_custom_call.1} parent=47 // pred_check_branch
          %331 = sbr.rel (%p329) target = $region52
        $region51: #{tpu_custom_call.1} parent=47 // pred_region
          %s332 = sadd.s32 %s28, %s27
          %p333 = scmp.lt.s32.totalorder %s332, 7
          %s334 = scalar_select %p333, %s332, 7
          %s335 = smul.addr %s334, 8
          %s336 = scalar_lea.vmem %s0, %s335
          %s337 = sadd.s32 %s28, %s27
        $region52: #{tpu_custom_call.1} parent=47 // pred_fallthru
          _
      $region48: #{tpu_custom_call.1} parent=5 // pred_fallthru
        _
      %p338 = scmp.le.s32.totalorder 1, %s20
      %p339 = scmp.lt.s32.totalorder %s20, 9
      %p340 = pnand %p338, %p339
      %p341 = pneg %p340
      // Predicated region
      $region53: #{tpu_custom_call.1} parent=5 // pred_check
        _
      $region54: #{tpu_custom_call.1} parent=5 // pred_check_branch
        %343 = sbr.rel (%p340) target = $region56
      $region55: #{tpu_custom_call.1} parent=5 // pred_region
        %s344 = ssub.s32 %s20, 1
        // Predicated region
        $region57: #{tpu_custom_call.1} parent=55 // pred_check
          %p345 = pneg %p123
        $region58: #{tpu_custom_call.1} parent=55 // pred_check_branch
          %347 = sbr.rel (%p345) target = $region60
        $region59: #{tpu_custom_call.1} parent=55 // pred_region
          %348 = dma.done [#allocation4], 2048
        $region60: #{tpu_custom_call.1} parent=55 // pred_fallthru
          _
        // Predicated region
        $region61: #{tpu_custom_call.1} parent=55 // pred_check
          %p349 = pneg %p165
        $region62: #{tpu_custom_call.1} parent=55 // pred_check_branch
          %351 = sbr.rel (%p349) target = $region64
        $region63: #{tpu_custom_call.1} parent=55 // pred_region
          %352 = dma.done [#allocation7], 6144
        $region64: #{tpu_custom_call.1} parent=55 // pred_fallthru
          _
        // Predicated region
        $region65: #{tpu_custom_call.1} parent=55 // pred_check
          %p353 = pneg %p207
        $region66: #{tpu_custom_call.1} parent=55 // pred_check_branch
          %355 = sbr.rel (%p353) target = $region68
        $region67: #{tpu_custom_call.1} parent=55 // pred_region
          %356 = dma.done [#allocation7], 6144
        $region68: #{tpu_custom_call.1} parent=55 // pred_fallthru
          _
        %s357 = sadd.s32 %s30, %s29
        %p358 = scmp.lt.s32.totalorder %s357, 7
        %s359 = scalar_select %p358, %s357, 7
        %s360 = smul.addr %s359, 8
        %s361 = scalar_lea.vmem %s0, %s360
        %p362 = pneg %p60
        %p363 = pneg %p57
        %p364 = pneg %p81
        %p365 = pneg %p78
        %p366 = pneg %p102
        %p367 = pneg %p99
        %p368 = pneg %p123
        %p369 = pneg %p120
        %p370 = pneg %p144
        %p371 = pneg %p141
        %p372 = pneg %p165
        %p373 = pneg %p162
        %p374 = pneg %p186
        %p375 = pneg %p183
        %p376 = pneg %p207
        %p377 = pneg %p204
        %p378 = pneg %p228
        %p379 = pneg %p225
        %p380 = pneg %p256
        %p381 = pneg %p253
        %s382 = sand.u32 %s243, 1
        %s383 = scalar_lea.sflag [#allocation5], %s382
        %s384 = sand.u32 %s243, 1
        %s385 = smul.addr %s384, 8
        %s386 = scalar_lea.vmem [#allocation9], %s385
        %s387 = sadd.s32 %s30, %s29
        %p388 = scmp.lt.s32.totalorder %s387, 7
        %s389 = scalar_select %p388, %s387, 7
        %s390 = smul.addr %s389, 8
        %s391 = scalar_lea.vmem %s0, %s390
        %s392 = sadd.s32 %s30, %s29
        %s393 = sadd.s32 %s30, %s29
        %p394 = scmp.eq.s32.totalorder %s30, 0
        // Predicated region
        $region69: #{tpu_custom_call.1} parent=55 // pred_check
          %p395 = pneg %p394
        $region70: #{tpu_custom_call.1} parent=55 // pred_check_branch
          %397 = sbr.rel (%p395) target = $region72
        $region71: #{tpu_custom_call.1} parent=55 // pred_region
          %398 = vst [vmem:[#allocation2] sm:$0xff] 0.0
        $region72: #{tpu_custom_call.1} parent=55 // pred_fallthru
          _
        %v399 = vld [vmem:[%s391] sm:$0xff]
        %v400 = vld [vmem:[%s1] sm:$0xff]
        %v401 = vld [vmem:[%s1 + $0x8] sm:$0xff]
        %v402 = vld [vmem:[%s1 + $0x10] sm:$0xff]
        %v403 = vld [vmem:[%s1 + $0x18] sm:$0xff]
        %v404 = vld [vmem:[%s2] sm:$0x1]
        %v406 = vlaneseq
        %v407 = vshrl.u32 %v406, 7
        %v408 = vsub.s32 0, %v407
        %v409 = vrot.slane %v404, %v408
        %vm411 = vcmask 261120
        %v413 = vsel %vm411, %v399, 0
        %415 = vmatprep.subr.mxu0 0.0
        %416 = vmatpush1.msra.mxu0 0.0
        %417 = vmatprep.subr.mxu0 0.0
        %418 = vmatpush1.msra.mxu0 0.0
        %419 = vmatprep.subr.mxu0 0.0
        %420 = vmatpush1.msra.mxu0 0.0
        %421 = vmatprep.subr.mxu0 0.0
        %422 = vmatpush1.msra.mxu0 0.0
        %423 = vmatprep.subr.mxu0 0.0
        %424 = vmatpush1.msra.mxu0 0.0
        %425 = vmatprep.subr.mxu0 0.0
        %426 = vmatpush1.msra.mxu0 0.0
        %427 = vmatprep.subr.mxu0 0.0
        %428 = vmatpush1.msra.mxu0 0.0
        %429 = vmatprep.subr.mxu0 0.0
        %430 = vmatpush1.msra.mxu0 0.0
        %431 = vmatprep.subr.mxu0 0.0
        %432 = vmatpush1.msra.mxu0 0.0
        %433 = vmatprep.subr.mxu0 0.0
        %434 = vmatpush1.msra.mxu0 0.0
        %435 = vmatprep.subr.mxu0 0.0
        %436 = vmatpush1.msra.mxu0 0.0
        %437 = vmatprep.subr.mxu0 0.0
        %438 = vmatpush1.msra.mxu0 0.0
        %439 = vmatprep.subr.mxu0 0.0
        %440 = vmatpush1.msra.mxu0 %v403
        %441 = vmatprep.subr.mxu0 0.0
        %442 = vmatpush1.msra.mxu0 %v402
        %443 = vmatprep.subr.mxu0 0.0
        %444 = vmatpush1.msra.mxu0 %v401
        %445 = vmatprep.subr.mxu0 0.0
        %446 = vmatpush1.msra.mxu0 %v400
        %447 = vmatprep.subr.mxu0 0.0
        %448 = vmatpush2.msra.mxu0 0.0
        %449 = vmatprep.subr.mxu0 0.0
        %450 = vmatpush2.msra.mxu0 0.0
        %451 = vmatprep.subr.mxu0 0.0
        %452 = vmatpush2.msra.mxu0 0.0
        %453 = vmatprep.subr.mxu0 0.0
        %454 = vmatpush2.msra.mxu0 0.0
        %455 = vmatprep.subr.mxu0 0.0
        %456 = vmatpush2.msra.mxu0 0.0
        %457 = vmatprep.subr.mxu0 0.0
        %458 = vmatpush2.msra.mxu0 0.0
        %459 = vmatprep.subr.mxu0 0.0
        %460 = vmatpush2.msra.mxu0 0.0
        %461 = vmatprep.subr.mxu0 0.0
        %462 = vmatpush2.msra.mxu0 0.0
        %463 = vmatprep.subr.mxu0 0.0
        %464 = vmatpush2.msra.mxu0 0.0
        %465 = vmatprep.subr.mxu0 0.0
        %466 = vmatpush2.msra.mxu0 0.0
        %467 = vmatprep.subr.mxu0 0.0
        %468 = vmatpush2.msra.mxu0 0.0
        %469 = vmatprep.subr.mxu0 0.0
        %470 = vmatpush2.msra.mxu0 0.0
        %471 = vmatprep.subr.mxu0 0.0
        %472 = vmatpush2.msra.mxu0 0.0
        %473 = vmatprep.subr.mxu0 0.0
        %474 = vmatpush2.msra.mxu0 0.0
        %475 = vmatprep.subr.mxu0 0.0
        %476 = vmatpush2.msra.mxu0 0.0
        %477 = vmatprep.subr.mxu0 0.0
        %478 = vmatpush2.msra.mxu0 0.0
        %479 = vmatprep.mubr.f32.mxu0 0.0
        %480 = vmatmul.mubr.f32.gmra.mxu0 %v413
        %v481 = vpop.f32.mrf.mxu0
        %v482 = vadd.f32 %v409, %v481
        %v483 = vpop.f32.mrf.mxu0
        %484 = vdwg.mxu0
        %v485 = vmax.f32 %v482, 0.0
        %v486 = vld [vmem:[#allocation3] sm:$0xff]
        %v487 = vld [vmem:[#allocation3 + $0x8] sm:$0xff]
        %v488 = vld [vmem:[#allocation3 + $0x10] sm:$0xff]
        %v489 = vld [vmem:[#allocation3 + $0x18] sm:$0xff]
        %v490 = vld [vmem:[#allocation3 + $0x20] sm:$0xff]
        %v491 = vld [vmem:[#allocation3 + $0x28] sm:$0xff]
        %v492 = vld [vmem:[#allocation3 + $0x30] sm:$0xff]
        %v493 = vld [vmem:[#allocation3 + $0x38] sm:$0xff]
        %v494 = vld [vmem:[#allocation3 + $0x40] sm:$0xff]
        %v495 = vld [vmem:[#allocation3 + $0x48] sm:$0xff]
        %v496 = vld [vmem:[#allocation3 + $0x50] sm:$0xff]
        %v497 = vld [vmem:[#allocation3 + $0x58] sm:$0xff]
        %v498 = vld [vmem:[#allocation3 + $0x60] sm:$0xff]
        %v499 = vld [vmem:[#allocation3 + $0x68] sm:$0xff]
        %v500 = vld [vmem:[#allocation3 + $0x70] sm:$0xff]
        %v501 = vld [vmem:[#allocation3 + $0x78] sm:$0xff]
        %v502 = vld [vmem:[%s4] sm:$0x1]
        %v504 = vlaneseq
        %v505 = vshrl.u32 %v504, 7
        %v506 = vsub.s32 0, %v505
        %v507 = vrot.slane %v502, %v506
        %509 = vmatprep.subr.mxu0 0.0
        %510 = vmatpush1.msra.mxu0 %v501
        %511 = vmatprep.subr.mxu0 0.0
        %512 = vmatpush1.msra.mxu0 %v500
        %513 = vmatprep.subr.mxu0 0.0
        %514 = vmatpush1.msra.mxu0 %v499
        %515 = vmatprep.subr.mxu0 0.0
        %516 = vmatpush1.msra.mxu0 %v498
        %517 = vmatprep.subr.mxu0 0.0
        %518 = vmatpush1.msra.mxu0 %v497
        %519 = vmatprep.subr.mxu0 0.0
        %520 = vmatpush1.msra.mxu0 %v496
        %521 = vmatprep.subr.mxu0 0.0
        %522 = vmatpush1.msra.mxu0 %v495
        %523 = vmatprep.subr.mxu0 0.0
        %524 = vmatpush1.msra.mxu0 %v494
        %525 = vmatprep.subr.mxu0 0.0
        %526 = vmatpush1.msra.mxu0 %v493
        %527 = vmatprep.subr.mxu0 0.0
        %528 = vmatpush1.msra.mxu0 %v492
        %529 = vmatprep.subr.mxu0 0.0
        %530 = vmatpush1.msra.mxu0 %v491
        %531 = vmatprep.subr.mxu0 0.0
        %532 = vmatpush1.msra.mxu0 %v490
        %533 = vmatprep.subr.mxu0 0.0
        %534 = vmatpush1.msra.mxu0 %v489
        %535 = vmatprep.subr.mxu0 0.0
        %536 = vmatpush1.msra.mxu0 %v488
        %537 = vmatprep.subr.mxu0 0.0
        %538 = vmatpush1.msra.mxu0 %v487
        %539 = vmatprep.subr.mxu0 0.0
        %540 = vmatpush1.msra.mxu0 %v486
        %541 = vmatprep.subr.mxu0 0.0
        %542 = vmatpush2.msra.mxu0 0.0
        %543 = vmatprep.subr.mxu0 0.0
        %544 = vmatpush2.msra.mxu0 0.0
        %545 = vmatprep.subr.mxu0 0.0
        %546 = vmatpush2.msra.mxu0 0.0
        %547 = vmatprep.subr.mxu0 0.0
        %548 = vmatpush2.msra.mxu0 0.0
        %549 = vmatprep.subr.mxu0 0.0
        %550 = vmatpush2.msra.mxu0 0.0
        %551 = vmatprep.subr.mxu0 0.0
        %552 = vmatpush2.msra.mxu0 0.0
        %553 = vmatprep.subr.mxu0 0.0
        %554 = vmatpush2.msra.mxu0 0.0
        %555 = vmatprep.subr.mxu0 0.0
        %556 = vmatpush2.msra.mxu0 0.0
        %557 = vmatprep.subr.mxu0 0.0
        %558 = vmatpush2.msra.mxu0 0.0
        %559 = vmatprep.subr.mxu0 0.0
        %560 = vmatpush2.msra.mxu0 0.0
        %561 = vmatprep.subr.mxu0 0.0
        %562 = vmatpush2.msra.mxu0 0.0
        %563 = vmatprep.subr.mxu0 0.0
        %564 = vmatpush2.msra.mxu0 0.0
        %565 = vmatprep.subr.mxu0 0.0
        %566 = vmatpush2.msra.mxu0 0.0
        %567 = vmatprep.subr.mxu0 0.0
        %568 = vmatpush2.msra.mxu0 0.0
        %569 = vmatprep.subr.mxu0 0.0
        %570 = vmatpush2.msra.mxu0 0.0
        %571 = vmatprep.subr.mxu0 0.0
        %572 = vmatpush2.msra.mxu0 0.0
        %573 = vmatprep.mubr.f32.mxu0 0.0
        %574 = vmatmul.mubr.f32.gmra.mxu0 %v485
        %v575 = vpop.f32.mrf.mxu0
        %v576 = vadd.f32 %v507, %v575
        %v577 = vpop.f32.mrf.mxu0
        %578 = vdwg.mxu0
        %v579 = vmax.f32 %v576, 0.0
        %v580 = vld [vmem:[#allocation6] sm:$0xff]
        %v581 = vld [vmem:[#allocation6 + $0x8] sm:$0xff]
        %v582 = vld [vmem:[#allocation6 + $0x10] sm:$0xff]
        %v583 = vld [vmem:[#allocation6 + $0x18] sm:$0xff]
        %v584 = vld [vmem:[#allocation6 + $0x20] sm:$0xff]
        %v585 = vld [vmem:[#allocation6 + $0x28] sm:$0xff]
        %v586 = vld [vmem:[#allocation6 + $0x30] sm:$0xff]
        %v587 = vld [vmem:[#allocation6 + $0x38] sm:$0xff]
        %v588 = vld [vmem:[#allocation6 + $0x40] sm:$0xff]
        %v589 = vld [vmem:[#allocation6 + $0x48] sm:$0xff]
        %v590 = vld [vmem:[#allocation6 + $0x50] sm:$0xff]
        %v591 = vld [vmem:[#allocation6 + $0x58] sm:$0xff]
        %v592 = vld [vmem:[#allocation6 + $0x60] sm:$0xff]
        %v593 = vld [vmem:[#allocation6 + $0x68] sm:$0xff]
        %v594 = vld [vmem:[#allocation6 + $0x70] sm:$0xff]
        %v595 = vld [vmem:[#allocation6 + $0x78] sm:$0xff]
        %v596 = vld [vmem:[#allocation6 + $0x80] sm:$0xff]
        %v597 = vld [vmem:[#allocation6 + $0x88] sm:$0xff]
        %v598 = vld [vmem:[#allocation6 + $0x90] sm:$0xff]
        %v599 = vld [vmem:[#allocation6 + $0x98] sm:$0xff]
        %v600 = vld [vmem:[#allocation6 + $0xa0] sm:$0xff]
        %v601 = vld [vmem:[#allocation6 + $0xa8] sm:$0xff]
        %v602 = vld [vmem:[#allocation6 + $0xb0] sm:$0xff]
        %v603 = vld [vmem:[#allocation6 + $0xb8] sm:$0xff]
        %v604 = vld [vmem:[#allocation6 + $0xc0] sm:$0xff]
        %v605 = vld [vmem:[#allocation6 + $0xc8] sm:$0xff]
        %v606 = vld [vmem:[#allocation6 + $0xd0] sm:$0xff]
        %v607 = vld [vmem:[#allocation6 + $0xd8] sm:$0xff]
        %v608 = vld [vmem:[#allocation6 + $0xe0] sm:$0xff]
        %v609 = vld [vmem:[#allocation6 + $0xe8] sm:$0xff]
        %v610 = vld [vmem:[#allocation6 + $0xf0] sm:$0xff]
        %v611 = vld [vmem:[#allocation6 + $0xf8] sm:$0xff]
        %v612 = vld [vmem:[#allocation6 + $0x100] sm:$0xff]
        %v613 = vld [vmem:[#allocation6 + $0x108] sm:$0xff]
        %v614 = vld [vmem:[#allocation6 + $0x110] sm:$0xff]
        %v615 = vld [vmem:[#allocation6 + $0x118] sm:$0xff]
        %v616 = vld [vmem:[#allocation6 + $0x120] sm:$0xff]
        %v617 = vld [vmem:[#allocation6 + $0x128] sm:$0xff]
        %v618 = vld [vmem:[#allocation6 + $0x130] sm:$0xff]
        %v619 = vld [vmem:[#allocation6 + $0x138] sm:$0xff]
        %v620 = vld [vmem:[#allocation6 + $0x140] sm:$0xff]
        %v621 = vld [vmem:[#allocation6 + $0x148] sm:$0xff]
        %v622 = vld [vmem:[#allocation6 + $0x150] sm:$0xff]
        %v623 = vld [vmem:[#allocation6 + $0x158] sm:$0xff]
        %v624 = vld [vmem:[#allocation6 + $0x160] sm:$0xff]
        %v625 = vld [vmem:[#allocation6 + $0x168] sm:$0xff]
        %v626 = vld [vmem:[#allocation6 + $0x170] sm:$0xff]
        %v627 = vld [vmem:[#allocation6 + $0x178] sm:$0xff]
        %v628 = vld [vmem:[%s6] sm:$0x7]
        %v630 = vlaneseq
        %v631 = vshrl.u32 %v630, 7
        %v632 = vsub.s32 0, %v631
        %v633 = vrot.slane %v628, %v632
        %v634 = vlaneseq
        %v635 = vshrl.u32 %v634, 7
        %v636 = vsub.s32 1, %v635
        %v637 = vrot.slane %v628, %v636
        %v638 = vlaneseq
        %v639 = vshrl.u32 %v638, 7
        %v640 = vsub.s32 2, %v639
        %v641 = vrot.slane %v628, %v640
        %645 = vmatprep.subr.mxu0 %v626
        %646 = vmatpush1.msra.mxu0 %v625
        %647 = vmatprep.subr.mxu0 %v623
        %648 = vmatpush1.msra.mxu0 %v622
        %649 = vmatprep.subr.mxu0 %v620
        %650 = vmatpush1.msra.mxu0 %v619
        %651 = vmatprep.subr.mxu0 %v617
        %652 = vmatpush1.msra.mxu0 %v616
        %653 = vmatprep.subr.mxu0 %v614
        %654 = vmatpush1.msra.mxu0 %v613
        %655 = vmatprep.subr.mxu0 %v611
        %656 = vmatpush1.msra.mxu0 %v610
        %657 = vmatprep.subr.mxu0 %v608
        %658 = vmatpush1.msra.mxu0 %v607
        %659 = vmatprep.subr.mxu0 %v605
        %660 = vmatpush1.msra.mxu0 %v604
        %661 = vmatprep.subr.mxu0 %v602
        %662 = vmatpush1.msra.mxu0 %v601
        %663 = vmatprep.subr.mxu0 %v599
        %664 = vmatpush1.msra.mxu0 %v598
        %665 = vmatprep.subr.mxu0 %v596
        %666 = vmatpush1.msra.mxu0 %v595
        %667 = vmatprep.subr.mxu0 %v593
        %668 = vmatpush1.msra.mxu0 %v592
        %669 = vmatprep.subr.mxu0 %v590
        %670 = vmatpush1.msra.mxu0 %v589
        %671 = vmatprep.subr.mxu0 %v587
        %672 = vmatpush1.msra.mxu0 %v586
        %673 = vmatprep.subr.mxu0 %v584
        %674 = vmatpush1.msra.mxu0 %v583
        %675 = vmatprep.subr.mxu0 %v581
        %676 = vmatpush1.msra.mxu0 %v580
        %677 = vmatprep.subr.mxu0 0.0
        %678 = vmatpush2.msra.mxu0 0.0
        %679 = vmatprep.subr.mxu0 0.0
        %680 = vmatpush2.msra.mxu0 0.0
        %681 = vmatprep.subr.mxu0 0.0
        %682 = vmatpush2.msra.mxu0 0.0
        %683 = vmatprep.subr.mxu0 0.0
        %684 = vmatpush2.msra.mxu0 0.0
        %685 = vmatprep.subr.mxu0 0.0
        %686 = vmatpush2.msra.mxu0 0.0
        %687 = vmatprep.subr.mxu0 0.0
        %688 = vmatpush2.msra.mxu0 0.0
        %689 = vmatprep.subr.mxu0 0.0
        %690 = vmatpush2.msra.mxu0 0.0
        %691 = vmatprep.subr.mxu0 0.0
        %692 = vmatpush2.msra.mxu0 0.0
        %693 = vmatprep.subr.mxu0 0.0
        %694 = vmatpush2.msra.mxu0 0.0
        %695 = vmatprep.subr.mxu0 0.0
        %696 = vmatpush2.msra.mxu0 0.0
        %697 = vmatprep.subr.mxu0 0.0
        %698 = vmatpush2.msra.mxu0 0.0
        %699 = vmatprep.subr.mxu0 0.0
        %700 = vmatpush2.msra.mxu0 0.0
        %701 = vmatprep.subr.mxu0 0.0
        %702 = vmatpush2.msra.mxu0 0.0
        %703 = vmatprep.subr.mxu0 0.0
        %704 = vmatpush2.msra.mxu0 0.0
        %705 = vmatprep.subr.mxu0 0.0
        %706 = vmatpush2.msra.mxu0 0.0
        %707 = vmatprep.subr.mxu0 0.0
        %708 = vmatpush2.msra.mxu0 0.0
        %709 = vmatprep.mubr.f32.mxu0 0.0
        %710 = vmatmul.mubr.f32.gmra.mxu0 %v579
        %v711 = vpop.f32.mrf.mxu0
        %v712 = vadd.f32 %v633, %v711
        %v713 = vpop.f32.mrf.mxu0
        %v714 = vadd.f32 %v637, %v713
        %715 = vdwg.mxu0
        %716 = vmatprep.subr.mxu0 0.0
        %717 = vmatpush1.msra.mxu0 %v627
        %718 = vmatprep.subr.mxu0 0.0
        %719 = vmatpush1.msra.mxu0 %v624
        %720 = vmatprep.subr.mxu0 0.0
        %721 = vmatpush1.msra.mxu0 %v621
        %722 = vmatprep.subr.mxu0 0.0
        %723 = vmatpush1.msra.mxu0 %v618
        %724 = vmatprep.subr.mxu0 0.0
        %725 = vmatpush1.msra.mxu0 %v615
        %726 = vmatprep.subr.mxu0 0.0
        %727 = vmatpush1.msra.mxu0 %v612
        %728 = vmatprep.subr.mxu0 0.0
        %729 = vmatpush1.msra.mxu0 %v609
        %730 = vmatprep.subr.mxu0 0.0
        %731 = vmatpush1.msra.mxu0 %v606
        %732 = vmatprep.subr.mxu0 0.0
        %733 = vmatpush1.msra.mxu0 %v603
        %734 = vmatprep.subr.mxu0 0.0
        %735 = vmatpush1.msra.mxu0 %v600
        %736 = vmatprep.subr.mxu0 0.0
        %737 = vmatpush1.msra.mxu0 %v597
        %738 = vmatprep.subr.mxu0 0.0
        %739 = vmatpush1.msra.mxu0 %v594
        %740 = vmatprep.subr.mxu0 0.0
        %741 = vmatpush1.msra.mxu0 %v591
        %742 = vmatprep.subr.mxu0 0.0
        %743 = vmatpush1.msra.mxu0 %v588
        %744 = vmatprep.subr.mxu0 0.0
        %745 = vmatpush1.msra.mxu0 %v585
        %746 = vmatprep.subr.mxu0 0.0
        %747 = vmatpush1.msra.mxu0 %v582
        %748 = vmatprep.subr.mxu0 0.0
        %749 = vmatpush2.msra.mxu0 0.0
        %750 = vmatprep.subr.mxu0 0.0
        %751 = vmatpush2.msra.mxu0 0.0
        %752 = vmatprep.subr.mxu0 0.0
        %753 = vmatpush2.msra.mxu0 0.0
        %754 = vmatprep.subr.mxu0 0.0
        %755 = vmatpush2.msra.mxu0 0.0
        %756 = vmatprep.subr.mxu0 0.0
        %757 = vmatpush2.msra.mxu0 0.0
        %758 = vmatprep.subr.mxu0 0.0
        %759 = vmatpush2.msra.mxu0 0.0
        %760 = vmatprep.subr.mxu0 0.0
        %761 = vmatpush2.msra.mxu0 0.0
        %762 = vmatprep.subr.mxu0 0.0
        %763 = vmatpush2.msra.mxu0 0.0
        %764 = vmatprep.subr.mxu0 0.0
        %765 = vmatpush2.msra.mxu0 0.0
        %766 = vmatprep.subr.mxu0 0.0
        %767 = vmatpush2.msra.mxu0 0.0
        %768 = vmatprep.subr.mxu0 0.0
        %769 = vmatpush2.msra.mxu0 0.0
        %770 = vmatprep.subr.mxu0 0.0
        %771 = vmatpush2.msra.mxu0 0.0
        %772 = vmatprep.subr.mxu0 0.0
        %773 = vmatpush2.msra.mxu0 0.0
        %774 = vmatprep.subr.mxu0 0.0
        %775 = vmatpush2.msra.mxu0 0.0
        %776 = vmatprep.subr.mxu0 0.0
        %777 = vmatpush2.msra.mxu0 0.0
        %778 = vmatprep.subr.mxu0 0.0
        %779 = vmatpush2.msra.mxu0 0.0
        %780 = vmatprep.mubr.f32.mxu0 0.0
        %781 = vmatmul.mubr.f32.gmra.mxu0 %v579
        %v782 = vpop.f32.mrf.mxu0
        %v783 = vadd.f32 %v641, %v782
        %v784 = vpop.f32.mrf.mxu0
        %785 = vdwg.mxu0
        %v786 = vld [vmem:[#allocation2] sm:$0xff]
        %v787 = vld [vmem:[#allocation8] sm:$0xff]
        %v788 = vld [vmem:[#allocation8 + $0x8] sm:$0xff]
        %v789 = vld [vmem:[#allocation8 + $0x10] sm:$0xff]
        %v790 = vld [vmem:[#allocation8 + $0x18] sm:$0xff]
        %v791 = vld [vmem:[#allocation8 + $0x20] sm:$0xff]
        %v792 = vld [vmem:[#allocation8 + $0x28] sm:$0xff]
        %v793 = vld [vmem:[#allocation8 + $0x30] sm:$0xff]
        %v794 = vld [vmem:[#allocation8 + $0x38] sm:$0xff]
        %v795 = vld [vmem:[#allocation8 + $0x40] sm:$0xff]
        %v796 = vld [vmem:[#allocation8 + $0x48] sm:$0xff]
        %v797 = vld [vmem:[#allocation8 + $0x50] sm:$0xff]
        %v798 = vld [vmem:[#allocation8 + $0x58] sm:$0xff]
        %v799 = vld [vmem:[#allocation8 + $0x60] sm:$0xff]
        %v800 = vld [vmem:[#allocation8 + $0x68] sm:$0xff]
        %v801 = vld [vmem:[#allocation8 + $0x70] sm:$0xff]
        %v802 = vld [vmem:[#allocation8 + $0x78] sm:$0xff]
        %v803 = vld [vmem:[#allocation8 + $0x80] sm:$0xff]
        %v804 = vld [vmem:[#allocation8 + $0x88] sm:$0xff]
        %v805 = vld [vmem:[#allocation8 + $0x90] sm:$0xff]
        %v806 = vld [vmem:[#allocation8 + $0x98] sm:$0xff]
        %v807 = vld [vmem:[#allocation8 + $0xa0] sm:$0xff]
        %v808 = vld [vmem:[#allocation8 + $0xa8] sm:$0xff]
        %v809 = vld [vmem:[#allocation8 + $0xb0] sm:$0xff]
        %v810 = vld [vmem:[#allocation8 + $0xb8] sm:$0xff]
        %v811 = vld [vmem:[#allocation8 + $0xc0] sm:$0xff]
        %v812 = vld [vmem:[#allocation8 + $0xc8] sm:$0xff]
        %v813 = vld [vmem:[#allocation8 + $0xd0] sm:$0xff]
        %v814 = vld [vmem:[#allocation8 + $0xd8] sm:$0xff]
        %v815 = vld [vmem:[#allocation8 + $0xe0] sm:$0xff]
        %v816 = vld [vmem:[#allocation8 + $0xe8] sm:$0xff]
        %v817 = vld [vmem:[#allocation8 + $0xf0] sm:$0xff]
        %v818 = vld [vmem:[#allocation8 + $0xf8] sm:$0xff]
        %v819 = vld [vmem:[#allocation8 + $0x100] sm:$0xff]
        %v820 = vld [vmem:[#allocation8 + $0x108] sm:$0xff]
        %v821 = vld [vmem:[#allocation8 + $0x110] sm:$0xff]
        %v822 = vld [vmem:[#allocation8 + $0x118] sm:$0xff]
        %v823 = vld [vmem:[#allocation8 + $0x120] sm:$0xff]
        %v824 = vld [vmem:[#allocation8 + $0x128] sm:$0xff]
        %v825 = vld [vmem:[#allocation8 + $0x130] sm:$0xff]
        %v826 = vld [vmem:[#allocation8 + $0x138] sm:$0xff]
        %v827 = vld [vmem:[#allocation8 + $0x140] sm:$0xff]
        %v828 = vld [vmem:[#allocation8 + $0x148] sm:$0xff]
        %v829 = vld [vmem:[#allocation8 + $0x150] sm:$0xff]
        %v830 = vld [vmem:[#allocation8 + $0x158] sm:$0xff]
        %v831 = vld [vmem:[#allocation8 + $0x160] sm:$0xff]
        %v832 = vld [vmem:[#allocation8 + $0x168] sm:$0xff]
        %v833 = vld [vmem:[#allocation8 + $0x170] sm:$0xff]
        %v834 = vld [vmem:[#allocation8 + $0x178] sm:$0xff]
        %v835 = vld [vmem:[%s8] sm:$0x7]
        %v837 = vlaneseq
        %v838 = vshrl.u32 %v837, 7
        %v839 = vsub.s32 0, %v838
        %v840 = vrot.slane %v835, %v839
        %v841 = vlaneseq
        %v842 = vshrl.u32 %v841, 7
        %v843 = vsub.s32 1, %v842
        %v844 = vrot.slane %v835, %v843
        %v845 = vlaneseq
        %v846 = vshrl.u32 %v845, 7
        %v847 = vsub.s32 2, %v846
        %v848 = vrot.slane %v835, %v847
        %852 = vmatprep.subr.mxu0 %v833
        %853 = vmatpush1.msra.mxu0 %v832
        %854 = vmatprep.subr.mxu0 %v830
        %855 = vmatpush1.msra.mxu0 %v829
        %856 = vmatprep.subr.mxu0 %v827
        %857 = vmatpush1.msra.mxu0 %v826
        %858 = vmatprep.subr.mxu0 %v824
        %859 = vmatpush1.msra.mxu0 %v823
        %860 = vmatprep.subr.mxu0 %v821
        %861 = vmatpush1.msra.mxu0 %v820
        %862 = vmatprep.subr.mxu0 %v818
        %863 = vmatpush1.msra.mxu0 %v817
        %864 = vmatprep.subr.mxu0 %v815
        %865 = vmatpush1.msra.mxu0 %v814
        %866 = vmatprep.subr.mxu0 %v812
        %867 = vmatpush1.msra.mxu0 %v811
        %868 = vmatprep.subr.mxu0 %v809
        %869 = vmatpush1.msra.mxu0 %v808
        %870 = vmatprep.subr.mxu0 %v806
        %871 = vmatpush1.msra.mxu0 %v805
        %872 = vmatprep.subr.mxu0 %v803
        %873 = vmatpush1.msra.mxu0 %v802
        %874 = vmatprep.subr.mxu0 %v800
        %875 = vmatpush1.msra.mxu0 %v799
        %876 = vmatprep.subr.mxu0 %v797
        %877 = vmatpush1.msra.mxu0 %v796
        %878 = vmatprep.subr.mxu0 %v794
        %879 = vmatpush1.msra.mxu0 %v793
        %880 = vmatprep.subr.mxu0 %v791
        %881 = vmatpush1.msra.mxu0 %v790
        %882 = vmatprep.subr.mxu0 %v788
        %883 = vmatpush1.msra.mxu0 %v787
        %884 = vmatprep.subr.mxu0 0.0
        %885 = vmatpush2.msra.mxu0 0.0
        %886 = vmatprep.subr.mxu0 0.0
        %887 = vmatpush2.msra.mxu0 0.0
        %888 = vmatprep.subr.mxu0 0.0
        %889 = vmatpush2.msra.mxu0 0.0
        %890 = vmatprep.subr.mxu0 0.0
        %891 = vmatpush2.msra.mxu0 0.0
        %892 = vmatprep.subr.mxu0 0.0
        %893 = vmatpush2.msra.mxu0 0.0
        %894 = vmatprep.subr.mxu0 0.0
        %895 = vmatpush2.msra.mxu0 0.0
        %896 = vmatprep.subr.mxu0 0.0
        %897 = vmatpush2.msra.mxu0 0.0
        %898 = vmatprep.subr.mxu0 0.0
        %899 = vmatpush2.msra.mxu0 0.0
        %900 = vmatprep.subr.mxu0 0.0
        %901 = vmatpush2.msra.mxu0 0.0
        %902 = vmatprep.subr.mxu0 0.0
        %903 = vmatpush2.msra.mxu0 0.0
        %904 = vmatprep.subr.mxu0 0.0
        %905 = vmatpush2.msra.mxu0 0.0
        %906 = vmatprep.subr.mxu0 0.0
        %907 = vmatpush2.msra.mxu0 0.0
        %908 = vmatprep.subr.mxu0 0.0
        %909 = vmatpush2.msra.mxu0 0.0
        %910 = vmatprep.subr.mxu0 0.0
        %911 = vmatpush2.msra.mxu0 0.0
        %912 = vmatprep.subr.mxu0 0.0
        %913 = vmatpush2.msra.mxu0 0.0
        %914 = vmatprep.subr.mxu0 0.0
        %915 = vmatpush2.msra.mxu0 0.0
        %916 = vmatprep.mubr.f32.mxu0 0.0
        %917 = vmatmul.mubr.f32.gmra.mxu0 %v786
        %v918 = vpop.f32.mrf.mxu0
        %v919 = vadd.f32 %v840, %v918
        %v920 = vpop.f32.mrf.mxu0
        %v921 = vadd.f32 %v844, %v920
        %922 = vdwg.mxu0
        %923 = vmatprep.subr.mxu0 0.0
        %924 = vmatpush1.msra.mxu0 %v834
        %925 = vmatprep.subr.mxu0 0.0
        %926 = vmatpush1.msra.mxu0 %v831
        %927 = vmatprep.subr.mxu0 0.0
        %928 = vmatpush1.msra.mxu0 %v828
        %929 = vmatprep.subr.mxu0 0.0
        %930 = vmatpush1.msra.mxu0 %v825
        %931 = vmatprep.subr.mxu0 0.0
        %932 = vmatpush1.msra.mxu0 %v822
        %933 = vmatprep.subr.mxu0 0.0
        %934 = vmatpush1.msra.mxu0 %v819
        %935 = vmatprep.subr.mxu0 0.0
        %936 = vmatpush1.msra.mxu0 %v816
        %937 = vmatprep.subr.mxu0 0.0
        %938 = vmatpush1.msra.mxu0 %v813
        %939 = vmatprep.subr.mxu0 0.0
        %940 = vmatpush1.msra.mxu0 %v810
        %941 = vmatprep.subr.mxu0 0.0
        %942 = vmatpush1.msra.mxu0 %v807
        %943 = vmatprep.subr.mxu0 0.0
        %944 = vmatpush1.msra.mxu0 %v804
        %945 = vmatprep.subr.mxu0 0.0
        %946 = vmatpush1.msra.mxu0 %v801
        %947 = vmatprep.subr.mxu0 0.0
        %948 = vmatpush1.msra.mxu0 %v798
        %949 = vmatprep.subr.mxu0 0.0
        %950 = vmatpush1.msra.mxu0 %v795
        %951 = vmatprep.subr.mxu0 0.0
        %952 = vmatpush1.msra.mxu0 %v792
        %953 = vmatprep.subr.mxu0 0.0
        %954 = vmatpush1.msra.mxu0 %v789
        %955 = vmatprep.subr.mxu0 0.0
        %956 = vmatpush2.msra.mxu0 0.0
        %957 = vmatprep.subr.mxu0 0.0
        %958 = vmatpush2.msra.mxu0 0.0
        %959 = vmatprep.subr.mxu0 0.0
        %960 = vmatpush2.msra.mxu0 0.0
        %961 = vmatprep.subr.mxu0 0.0
        %962 = vmatpush2.msra.mxu0 0.0
        %963 = vmatprep.subr.mxu0 0.0
        %964 = vmatpush2.msra.mxu0 0.0
        %965 = vmatprep.subr.mxu0 0.0
        %966 = vmatpush2.msra.mxu0 0.0
        %967 = vmatprep.subr.mxu0 0.0
        %968 = vmatpush2.msra.mxu0 0.0
        %969 = vmatprep.subr.mxu0 0.0
        %970 = vmatpush2.msra.mxu0 0.0
        %971 = vmatprep.subr.mxu0 0.0
        %972 = vmatpush2.msra.mxu0 0.0
        %973 = vmatprep.subr.mxu0 0.0
        %974 = vmatpush2.msra.mxu0 0.0
        %975 = vmatprep.subr.mxu0 0.0
        %976 = vmatpush2.msra.mxu0 0.0
        %977 = vmatprep.subr.mxu0 0.0
        %978 = vmatpush2.msra.mxu0 0.0
        %979 = vmatprep.subr.mxu0 0.0
        %980 = vmatpush2.msra.mxu0 0.0
        %981 = vmatprep.subr.mxu0 0.0
        %982 = vmatpush2.msra.mxu0 0.0
        %983 = vmatprep.subr.mxu0 0.0
        %984 = vmatpush2.msra.mxu0 0.0
        %985 = vmatprep.subr.mxu0 0.0
        %986 = vmatpush2.msra.mxu0 0.0
        %987 = vmatprep.mubr.f32.mxu0 0.0
        %988 = vmatmul.mubr.f32.gmra.mxu0 %v786
        %v989 = vpop.f32.mrf.mxu0
        %v990 = vadd.f32 %v848, %v989
        %v991 = vpop.f32.mrf.mxu0
        %992 = vdwg.mxu0
        %v993 = vadd.f32 %v712, %v919
        %v994 = vsub.f32 0.0, %v993
        %v995 = vmul.f32 %v994, 1.442695
        %v996 = vpow.pop %v995
        %v997 = vadd.f32 %v996, 1.0
        %v998 = vrcp.pop %v997
        %v999 = vmul.f32 1.0, %v998
        %v1000 = vadd.f32 %v714, %v921
        %v1001 = vsub.f32 0.0, %v1000
        %v1002 = vmul.f32 %v1001, 1.442695
        %v1003 = vpow.pop %v1002
        %v1004 = vadd.f32 %v1003, 1.0
        %v1005 = vrcp.pop %v1004
        %v1006 = vmul.f32 1.0, %v1005
        %v1007 = vmul.f32 %v999, %v990
        %v1008 = vadd.f32 %v783, %v1007
        %v1009 = vtanh.pop %v1008
        %v1010 = vsub.f32 1.0, %v1006
        %v1011 = vmul.f32 %v1010, %v1009
        %v1012 = vmul.f32 %v1006, %v786
        %v1013 = vadd.f32 %v1011, %v1012
        %1014 = vst [vmem:[#allocation2] sm:$0xff] %v1013
        %1015 = vst [vmem:[%s386] sm:$0xff] %v1013
        %s1016 = sand.u32 %s243, 1
        %s1017 = scalar_lea.sflag [#allocation5], %s1016
        %s1018 = sand.u32 %s243, 1
        %s1019 = smul.addr %s1018, 8
        %s1020 = scalar_lea.vmem [#allocation9], %s1019
        // Predicated region
        $region73: #{tpu_custom_call.1} parent=55 // pred_check
          %p1021 = pneg %p253
        $region74: #{tpu_custom_call.1} parent=55 // pred_check_branch
          %1023 = sbr.rel (%p1021) target = $region76
        $region75: #{tpu_custom_call.1} parent=55 // pred_region
          %s1024 = sadd.s32 %s30, %s29
          %s1026 = ssub.s32 128, 128
          %1027 = vsyncadd %s1017, %s1026
          %s1028 = smul.addr %s1024, 128
          %s1029 = scalar_lea.hbm %s9, %s1028
          %s1031 = sshll.u32 %s1020, 4
          %s1032 = int_to_ptr.vmem [resolvable:$true] %s1031
          %1034 = dma.vmem_to_hbm [thread:$0]  %s1032, 128, %s1029, %s1017
        $region76: #{tpu_custom_call.1} parent=55 // pred_fallthru
          _
      $region56: #{tpu_custom_call.1} parent=5 // pred_fallthru
        _
      %p1035 = scmp.le.s32.totalorder 2, %s20
      // Predicated region
      $region77: #{tpu_custom_call.1} parent=5 // pred_check
        %p1036 = pneg %p1035
      $region78: #{tpu_custom_call.1} parent=5 // pred_check_branch
        %1038 = sbr.rel (%p1036) target = $region80
      $region79: #{tpu_custom_call.1} parent=5 // pred_region
        %s1039 = ssub.s32 %s20, 2
        // Predicated region
        $region81: #{tpu_custom_call.1} parent=79 // pred_check
          %p1040 = pneg %p259
        $region82: #{tpu_custom_call.1} parent=79 // pred_check_branch
          %1042 = sbr.rel (%p1040) target = $region84
        $region83: #{tpu_custom_call.1} parent=79 // pred_region
          %s1043 = sand.u32 %s244, 1
          %s1044 = scalar_lea.sflag [#allocation5], %s1043
          %s1045 = sand.u32 %s244, 1
          %s1046 = smul.addr %s1045, 8
          %s1047 = scalar_lea.vmem [#allocation9], %s1046
          %1048 = dma.done %s1044, 128
        $region84: #{tpu_custom_call.1} parent=79 // pred_fallthru
          _
      $region80: #{tpu_custom_call.1} parent=5 // pred_fallthru
        _
    $region6: #{tpu_custom_call.1} parent=1 // loop_footer
      %s24 = sadd.s32 1, %s20
    $region7: #{tpu_custom_call.1} parent=1 // loop_footer_branch
      %19 = sbr.rel target = $region3
    $region8: #{tpu_custom_call.1} parent=1 // loop_exit
      _
    %1049 = vsyncpa [#allocation4], 1
    %s1050 = scalar_lea.sflag [#allocation4], 1
    %1051 = vsyncpa %s1050, 1
    %1052 = vsyncpa [#allocation7], 1
    %1053 = vsyncpa [#allocation5], 1
    %s1054 = scalar_lea.sflag [#allocation5], 1
    %1055 = vsyncpa %s1054, 1

</llo_original>
